<compile_context>
chip_gen: v5e
topology: v5e:2x2
jax: 0.10.0
libtpu: 0.0.40
codegen_flags: <defaults>
</compile_context>

<pallas_src>
import functools
import math

import jax
import jax.numpy as jnp
from jax.experimental import pallas as pl
from jax.experimental.pallas import tpu as pltpu


# ----------------------------------------------------------------------------
# Kernels
# ----------------------------------------------------------------------------
def _qkv_proj_kernel(x_ref, w_ref, b_ref, o_ref):
    # x: (TR, D), w: (D, 3D), b: (1, 3D) -> o: (TR, 3D)   (fused Q/K/V projection)
    o_ref[...] = (
        jnp.dot(x_ref[...], w_ref[...], preferred_element_type=jnp.float32)
        + b_ref[...]
    ).astype(o_ref.dtype)


def _attention_kernel(q_ref, k_ref, v_ref, m_ref, ctx_ref, probs_ref, *, scale):
    # Blocks carry a leading batch dim of 1; all heads handled in one shot.
    q = q_ref[...][0].astype(jnp.float32)        # (H, S, dk)
    k = k_ref[...][0].astype(jnp.float32)        # (H, S, dk)
    v = v_ref[...][0].astype(jnp.float32)        # (H, S, dk)
    mask = m_ref[...][0, 0]                      # (S, S)

    s = jnp.einsum("hqd,hkd->hqk", q, k,
                   preferred_element_type=jnp.float32) * scale
    s = jnp.where(mask[None, :, :] == 0, -1e10, s)

    s_max = jnp.max(s, axis=-1, keepdims=True)
    e = jnp.exp(s - s_max)
    p = e / jnp.sum(e, axis=-1, keepdims=True)   # softmax over keys

    # dropout(attn_probs) is identity in eval mode.
    ctx = jnp.einsum("hqk,hkd->hqd", p, v, preferred_element_type=jnp.float32)

    ctx_ref[...] = ctx[None].astype(ctx_ref.dtype)
    probs_ref[...] = p[None].astype(probs_ref.dtype)


def _attn_out_ln_kernel(a_ref, res_ref, wo_ref, bo_ref, g_ref, b_ref, o_ref):
    # Output projection + residual + LayerNorm (eps=1e-5, biased variance).
    y = jnp.dot(a_ref[...], wo_ref[...],
                preferred_element_type=jnp.float32) + bo_ref[...]
    h = res_ref[...].astype(jnp.float32) + y     # residual (dropout = identity)
    mu = jnp.mean(h, axis=-1, keepdims=True)
    var = jnp.mean(jnp.square(h - mu), axis=-1, keepdims=True)
    hn = (h - mu) * jax.lax.rsqrt(var + 1e-5)
    o_ref[...] = (hn * g_ref[...] + b_ref[...]).astype(o_ref.dtype)


def _ffn_ln_kernel(x_ref, w1_ref, b1_ref, w2_ref, b2_ref, g_ref, b_ref, o_ref):
    # Linear -> ReLU -> Linear, residual + LayerNorm, all fused.
    x = x_ref[...].astype(jnp.float32)
    h = jnp.maximum(
        jnp.dot(x, w1_ref[...], preferred_element_type=jnp.float32) + b1_ref[...],
        0.0)
    y = jnp.dot(h, w2_ref[...], preferred_element_type=jnp.float32) + b2_ref[...]
    z = x + y                                    # residual (dropout = identity)
    mu = jnp.mean(z, axis=-1, keepdims=True)
    var = jnp.mean(jnp.square(z - mu), axis=-1, keepdims=True)
    zn = (z - mu) * jax.lax.rsqrt(var + 1e-5)
    o_ref[...] = (zn * g_ref[...] + b_ref[...]).astype(o_ref.dtype)


# ----------------------------------------------------------------------------
# Wrappers
# ----------------------------------------------------------------------------
def _row_tile(n_rows: int, cap: int = 1024) -> int:
    """Largest row tile <= cap that divides n_rows (full array if it all fits)."""
    if n_rows <= cap:
        return n_rows
    t = cap
    while t >= 8:
        if n_rows % t == 0:
            return t
        t //= 2
    return n_rows  # fallback: single full block


def _qkv_projection(x2d, w_qkv, b_qkv):
    n, d = x2d.shape
    dout = w_qkv.shape[1]
    tr = _row_tile(n)
    return pl.pallas_call(
        _qkv_proj_kernel,
        grid=(n // tr,),
        in_specs=[
            pl.BlockSpec((tr, d), lambda i: (i, 0)),
            pl.BlockSpec((d, dout), lambda i: (0, 0)),
            pl.BlockSpec((1, dout), lambda i: (0, 0)),
        ],
        out_specs=pl.BlockSpec((tr, dout), lambda i: (i, 0)),
        out_shape=jax.ShapeDtypeStruct((n, dout), x2d.dtype),
        compiler_params=pltpu.CompilerParams(dimension_semantics=("parallel",)),
    )(x2d, w_qkv, b_qkv)


def _attention(q, k, v, mask, scale):
    B, H, S, dk = q.shape
    kern = functools.partial(_attention_kernel, scale=scale)
    ctx, probs = pl.pallas_call(
        kern,
        grid=(B,),
        in_specs=[
            pl.BlockSpec((1, H, S, dk), lambda b: (b, 0, 0, 0)),
            pl.BlockSpec((1, H, S, dk), lambda b: (b, 0, 0, 0)),
            pl.BlockSpec((1, H, S, dk), lambda b: (b, 0, 0, 0)),
            pl.BlockSpec((1, 1, S, S), lambda b: (b, 0, 0, 0)),
        ],
        out_specs=(
            pl.BlockSpec((1, H, S, dk), lambda b: (b, 0, 0, 0)),
            pl.BlockSpec((1, H, S, S), lambda b: (b, 0, 0, 0)),
        ),
        out_shape=(
            jax.ShapeDtypeStruct((B, H, S, dk), jnp.float32),
            jax.ShapeDtypeStruct((B, H, S, S), jnp.float32),
        ),
        compiler_params=pltpu.CompilerParams(dimension_semantics=("parallel",)),
    )(q, k, v, mask)
    return ctx, probs


def _attn_out_residual_ln(a2d, res2d, wo, bo, gamma, beta):
    n, d = a2d.shape
    tr = _row_tile(n)
    row = pl.BlockSpec((tr, d), lambda i: (i, 0))
    full = lambda shp: pl.BlockSpec(shp, lambda i: (0, 0))
    return pl.pallas_call(
        _attn_out_ln_kernel,
        grid=(n // tr,),
        in_specs=[row, row, full(wo.shape), full(bo.shape),
                  full(gamma.shape), full(beta.shape)],
        out_specs=row,
        out_shape=jax.ShapeDtypeStruct((n, d), a2d.dtype),
        compiler_params=pltpu.CompilerParams(dimension_semantics=("parallel",)),
    )(a2d, res2d, wo, bo, gamma, beta)


def _ffn_residual_ln(x2d, w1, b1, w2, b2, gamma, beta):
    n, d = x2d.shape
    tr = _row_tile(n)
    row = pl.BlockSpec((tr, d), lambda i: (i, 0))
    full = lambda shp: pl.BlockSpec(shp, lambda i: (0, 0))
    return pl.pallas_call(
        _ffn_ln_kernel,
        grid=(n // tr,),
        in_specs=[row, full(w1.shape), full(b1.shape), full(w2.shape),
                  full(b2.shape), full(gamma.shape), full(beta.shape)],
        out_specs=row,
        out_shape=jax.ShapeDtypeStruct((n, d), x2d.dtype),
        compiler_params=pltpu.CompilerParams(dimension_semantics=("parallel",)),
    )(x2d, w1, b1, w2, b2, gamma, beta)


def encoder_layer_forward(src, src_mask, params):
    """Eval-mode EncoderLayer forward. src: (B,S,D); src_mask: (B,1,S,S)."""
    B, S, D = src.shape
    H = params["n_heads"]
    dk = D // H

    x2d = src.reshape(B * S, D)

    # Fused QKV projection (one lane-dense matmul over the flattened rows).
    w_qkv = jnp.concatenate([params["wq"], params["wk"], params["wv"]], axis=1)
    b_qkv = jnp.concatenate([params["bq"], params["bk"], params["bv"]], axis=1)
    qkv = _qkv_projection(x2d, w_qkv, b_qkv)                       # (B*S, 3D)

    def to_heads(t):
        return t.reshape(B, S, H, dk).transpose(0, 2, 1, 3)        # (B, H, S, dk)

    q = to_heads(qkv[:, 0 * D:1 * D])
    k = to_heads(qkv[:, 1 * D:2 * D])
    v = to_heads(qkv[:, 2 * D:3 * D])

    ctx, attn_probs = _attention(q, k, v, src_mask, 1.0 / math.sqrt(dk))

    a2d = ctx.astype(src.dtype).transpose(0, 2, 1, 3).reshape(B * S, D)
    h1 = _attn_out_residual_ln(a2d, x2d, params["wo"], params["bo"],
                               params["ln1_g"], params["ln1_b"])
    h2 = _ffn_residual_ln(h1, params["w1"], params["b1"],
                          params["w2"], params["b2"],
                          params["ln2_g"], params["ln2_b"])
    return h2.reshape(B, S, D), attn_probs


# ----------------------------------------------------------------------------
# Pure-JAX reference (for correctness check)
# ----------------------------------------------------------------------------
def encoder_layer_reference(src, mask, p):
    B, S, D = src.shape
    H = p["n_heads"]
    dk = D // H

    def split(t):
        return t.reshape(B, S, H, dk).transpose(0, 2, 1, 3)

    q = split(src @ p["wq"] + p["bq"])
    k = split(src @ p["wk"] + p["bk"])
    v = split(src @ p["wv"] + p["bv"])

    s = jnp.einsum("bhqd,bhkd->bhqk", q, k) / math.sqrt(dk)
    s = jnp.where(mask == 0, -1e10, s)
    probs = jax.nn.softmax(s, axis=-1)
    ctx = jnp.einsum("bhqk,bhkd->bhqd", probs, v)
    a = ctx.transpose(0, 2, 1, 3).reshape(B, S, D)
    attn_out = a @ p["wo"] + p["bo"]

    def ln(x, g, b):
        mu = x.mean(-1, keepdims=True)
        var = jnp.square(x - mu).mean(-1, keepdims=True)
        return (x - mu) / jnp.sqrt(var + 1e-5) * g + b

    h1 = ln(src + attn_out, p["ln1_g"], p["ln1_b"])
    ff = jnp.maximum(h1 @ p["w1"] + p["b1"], 0.0) @ p["w2"] + p["b2"]
    h2 = ln(h1 + ff, p["ln2_g"], p["ln2_b"])
    return h2, probs


def init_encoder_params(key, d_model, n_heads, d_ffn):
    ks = jax.random.split(key, 12)

    def w(k, fan_in, fan_out):
        return jax.random.normal(k, (fan_in, fan_out), jnp.float32) / math.sqrt(fan_in)

    def b(k, width):
        return 0.1 * jax.random.normal(k, (1, width), jnp.float32)

    return dict(
        n_heads=n_heads,
        wq=w(ks[0], d_model, d_model), bq=b(ks[6], d_model),
        wk=w(ks[1], d_model, d_model), bk=b(ks[7], d_model),
        wv=w(ks[2], d_model, d_model), bv=b(ks[8], d_model),
        wo=w(ks[3], d_model, d_model), bo=b(ks[9], d_model),
        w1=w(ks[4], d_model, d_ffn),   b1=b(ks[10], d_ffn),
        w2=w(ks[5], d_ffn, d_model),   b2=b(ks[11], d_model),
        ln1_g=jnp.ones((1, d_model), jnp.float32),
        ln1_b=jnp.zeros((1, d_model), jnp.float32),
        ln2_g=jnp.ones((1, d_model), jnp.float32),
        ln2_b=jnp.zeros((1, d_model), jnp.float32),
    )


if __name__ == "__main__":
    B, S, D, H, F = 2, 8, 32, 4, 64

    key = jax.random.PRNGKey(0)
    k_src, k_par = jax.random.split(key)
    src = jax.random.normal(k_src, (B, S, D), jnp.float32)
    # Padding-style mask: batch 1 masks out the last two key positions.
    src_mask = jnp.ones((B, 1, S, S), jnp.float32).at[1, :, :, S - 2:].set(0.0)

    params = init_encoder_params(k_par, D, H, F)

    out, attn_probs = encoder_layer_forward(src, src_mask, params)
    out = jax.block_until_ready(out)
    attn_probs = jax.block_until_ready(attn_probs)

    ref_out, ref_probs = encoder_layer_reference(src, src_mask, params)
    assert out.shape == (B, S, D) and attn_probs.shape == (B, H, S, S)
    assert jnp.allclose(out, ref_out, atol=1e-2, rtol=1e-2), "output mismatch vs reference"
    assert jnp.allclose(attn_probs, ref_probs, atol=1e-2, rtol=1e-2), "attn_probs mismatch vs reference"

    print("KERNEL_OK")
</pallas_src>

<mosaic_0001>
module attributes {stable_mosaic.version = 11 : i64} {
  func.func @_qkv_proj_kernel(%arg0: i32, %arg1: memref<16x32xf32, #tpu.memory_space<vmem>>, %arg2: memref<32x96xf32, #tpu.memory_space<vmem>>, %arg3: memref<1x96xf32, #tpu.memory_space<vmem>>, %arg4: memref<16x96xf32, #tpu.memory_space<vmem>>) attributes {dimension_semantics = [#tpu.dimension_semantics<parallel>], iteration_bounds = array<i64: 1>, scalar_prefetch = 0 : i64, scratch_operands = 0 : i64, tpu.core_type = #tpu.core_type<tc>, window_params = [{transform_indices = @transform_0, window_bounds = array<i64: 16, 32>}, {pipeline_mode = #tpu.pipeline_mode<synchronous>, transform_indices = @transform_1, window_bounds = array<i64: 32, 96>}, {pipeline_mode = #tpu.pipeline_mode<synchronous>, transform_indices = @transform_2, window_bounds = array<i64: 1, 96>}, {transform_indices = @transform_3, window_bounds = array<i64: 16, 96>}]} {
    %c0 = arith.constant 0 : index
    %c0_0 = arith.constant 0 : index
    %0 = vector.load %arg1[%c0, %c0_0] : memref<16x32xf32, #tpu.memory_space<vmem>>, vector<16x32xf32>
    %c0_1 = arith.constant 0 : index
    %c0_2 = arith.constant 0 : index
    %1 = vector.load %arg2[%c0_1, %c0_2] : memref<32x96xf32, #tpu.memory_space<vmem>>, vector<32x96xf32>
    %cst = arith.constant dense<0.000000e+00> : vector<16x96xf32>
    %2 = tpu.matmul %0, %1, %cst {dimension_numbers = #tpu.dot_dimension_numbers<[1], [0], [0], [1], [0, 0, 1, 1], [], []>} : vector<16x32xf32>, vector<32x96xf32>, vector<16x96xf32> -> vector<16x96xf32>
    %c0_3 = arith.constant 0 : index
    %c0_4 = arith.constant 0 : index
    %3 = vector.load %arg3[%c0_3, %c0_4] : memref<1x96xf32, #tpu.memory_space<vmem>>, vector<1x96xf32>
    %4 = vector.broadcast %3 : vector<1x96xf32> to vector<16x96xf32>
    %5 = arith.addf %2, %4 : vector<16x96xf32>
    %c0_5 = arith.constant 0 : index
    %c0_6 = arith.constant 0 : index
    %6 = vector.load %arg4[%c0_5, %c0_6] : memref<16x96xf32, #tpu.memory_space<vmem>>, vector<16x96xf32>
    tpu.vector_store %arg4[%c0_5, %c0_6], %5 {strides = array<i32>} : memref<16x96xf32, #tpu.memory_space<vmem>>, vector<16x96xf32>,
    return
  }
  func.func @transform_0(%arg0: i32) -> (i32, i32) {
    %c0_i32 = arith.constant 0 : i32
    %c0_i32_0 = arith.constant 0 : i32
    return %arg0, %c0_i32 : i32, i32
  }
  func.func @transform_1(%arg0: i32) -> (i32, i32) {
    %c0_i32 = arith.constant 0 : i32
    %c0_i32_0 = arith.constant 0 : i32
    %c0_i32_1 = arith.constant 0 : i32
    return %c0_i32, %c0_i32_0 : i32, i32
  }
  func.func @transform_2(%arg0: i32) -> (i32, i32) {
    %c0_i32 = arith.constant 0 : i32
    %c0_i32_0 = arith.constant 0 : i32
    %c0_i32_1 = arith.constant 0 : i32
    return %c0_i32, %c0_i32_0 : i32, i32
  }
  func.func @transform_3(%arg0: i32) -> (i32, i32) {
    %c0_i32 = arith.constant 0 : i32
    %c0_i32_0 = arith.constant 0 : i32
    return %arg0, %c0_i32 : i32, i32
  }
}

</mosaic_0001>

<llo_original>
// kernel: tpu_custom_call.1
$region0: #{tpu_custom_call.1}
  #allocation0 [shape = 'u32[]', space=smem, size = 0x4, offset = 0x4, fixed_abs, tag = 'smem constant byte address 0x4 - core index']
  #allocation1 [shape = 'u32[72,128]{1,0:T(1,128)}', space=vmem, size = 0x9000, scoped, tag = 'internal scratch']
  %s0 = inlined_call_operand.hbm [shape: f32[16,32], index: 0, kind: input, shape index: {}]
  %s1 = inlined_call_operand.hbm [shape: f32[32,96], index: 1, kind: input, shape index: {}]
  %s2 = inlined_call_operand.vmem [shape: f32[1,96], index: 2, kind: input, shape index: {}]
  %s3 = inlined_call_operand.hbm [shape: f32[16,96], index: 3, kind: output, shape index: {}]
  %s4 = sld [smem:[#allocation0]]
  $region30: #{tpu_custom_call.1} parent=0
    _
  %s6 = ssub.s32 1, %s4
  %s7 = scalar_select 0, %s6, %s4
  $region1: #{tpu_custom_call.1} parent=0
    #allocation2 [shape = 'u8[8192]{0}', space=vmem, size = 0x2000, scoped, tag = 'input window, operand 0, single buffered']
    #allocation3 [shape = 's32[1]{0}', space=sflag, size = 0x4, scoped, tag = 'scoped memory for tpu_custom_call.1']
    #allocation4 [shape = 's32[1]{0}', space=sflag, size = 0x4, scoped, tag = 'scoped memory for tpu_custom_call.1']
    #allocation5 [shape = 'u8[16384]{0}', space=vmem, size = 0x4000, scoped, tag = 'input window, operand 1, single buffered']
    #allocation6 [shape = 's32[1]{0}', space=sflag, size = 0x4, scoped, tag = 'scoped memory for tpu_custom_call.1']
    #allocation7 [shape = 'u8[8192]{0}', space=vmem, size = 0x2000, scoped, tag = 'output window, operand 0, single buffered']
    %8 = vsyncpa [#allocation3], 0
    %9 = vsyncpa [#allocation6], 0
    %10 = vsyncpa [#allocation4], 0
    // Predicated region
    $region2: #{tpu_custom_call.1} parent=1 // pred_check
      _
    $region3: #{tpu_custom_call.1} parent=1 // pred_check_branch
      %12 = sbr.rel (0) target = $region5
    $region4: #{tpu_custom_call.1} parent=1 // pred_region
      %14 = vsyncadd [#allocation3], 0
      %s15 = sshll.u32 %s0, 4
      %s16 = int_to_ptr.hbm [resolvable:$true] %s15
      %s17 = sshll.u32 [#allocation2], 4
      %s18 = int_to_ptr.vmem [resolvable:$true] %s17
      %23 = dma.hbm_to_vmem [thread:$0]  %s16, 256, %s18, [#allocation3], 128, 128, 8
    $region5: #{tpu_custom_call.1} parent=1 // pred_fallthru
      _
    // Predicated region
    $region6: #{tpu_custom_call.1} parent=1 // pred_check
      _
    $region7: #{tpu_custom_call.1} parent=1 // pred_check_branch
      %25 = sbr.rel (0) target = $region9
    $region8: #{tpu_custom_call.1} parent=1 // pred_region
      %27 = vsyncadd [#allocation6], 0
      %s28 = sshll.u32 %s1, 4
      %s29 = int_to_ptr.hbm [resolvable:$true] %s28
      %s30 = sshll.u32 [#allocation5], 4
      %s31 = int_to_ptr.vmem [resolvable:$true] %s30
      %36 = dma.hbm_to_vmem [thread:$0]  %s29, 512, %s31, [#allocation6], 128, 128, 8
    $region9: #{tpu_custom_call.1} parent=1 // pred_fallthru
      _
    // Predicated region
    $region10: #{tpu_custom_call.1} parent=1 // pred_check
      _
    $region11: #{tpu_custom_call.1} parent=1 // pred_check_branch
      %38 = sbr.rel (0) target = $region13
    $region12: #{tpu_custom_call.1} parent=1 // pred_region
      _
    $region13: #{tpu_custom_call.1} parent=1 // pred_fallthru
      _
    // Predicated region
    $region14: #{tpu_custom_call.1} parent=1 // pred_check
      _
    $region15: #{tpu_custom_call.1} parent=1 // pred_check_branch
      %40 = sbr.rel (0) target = $region17
    $region16: #{tpu_custom_call.1} parent=1 // pred_region
      %42 = dma.done [#allocation3], 256
    $region17: #{tpu_custom_call.1} parent=1 // pred_fallthru
      _
    // Predicated region
    $region18: #{tpu_custom_call.1} parent=1 // pred_check
      _
    $region19: #{tpu_custom_call.1} parent=1 // pred_check_branch
      %44 = sbr.rel (0) target = $region21
    $region20: #{tpu_custom_call.1} parent=1 // pred_region
      %46 = dma.done [#allocation6], 512
    $region21: #{tpu_custom_call.1} parent=1 // pred_fallthru
      _
    %v47 = vld [vmem:[#allocation2] sm:$0xff]
    %v48 = vld [vmem:[#allocation2 + $0x8] sm:$0xff]
    %v49 = vld [vmem:[#allocation5] sm:$0xff]
    %v50 = vld [vmem:[#allocation5 + $0x8] sm:$0xff]
    %v51 = vld [vmem:[#allocation5 + $0x10] sm:$0xff]
    %v52 = vld [vmem:[#allocation5 + $0x18] sm:$0xff]
    %v53 = vld [vmem:[%s2] sm:$0x1]
    %v55 = vperm.slane %v53, 0
    %vm57 = vcmask 261120
    %v59 = vsel %vm57, %v47, 0
    %v62 = vsel %vm57, %v48, 0
    %64 = vmatpush.msra.mxu0 0.0
    %65 = vmatpush.msra.mxu0 0.0
    %66 = vmatpush.msra.mxu0 0.0
    %67 = vmatpush.msra.mxu0 0.0
    %68 = vmatpush.msra.mxu0 0.0
    %69 = vmatpush.msra.mxu0 0.0
    %70 = vmatpush.msra.mxu0 0.0
    %71 = vmatpush.msra.mxu0 0.0
    %72 = vmatpush.msra.mxu0 0.0
    %73 = vmatpush.msra.mxu0 0.0
    %74 = vmatpush.msra.mxu0 0.0
    %75 = vmatpush.msra.mxu0 0.0
    %76 = vmatpush.msra.mxu0 %v52
    %77 = vmatpush.msra.mxu0 %v51
    %78 = vmatpush.msra.mxu0 %v50
    %79 = vmatpush.msra.mxu0 %v49
    %80 = vmatmul.f32.gmra.mxu0 %v59
    %v81 = vpop.f32.mrf.mxu0
    %v82 = vadd.f32 %v55, %v81
    %83 = vmatmul.f32.gmra.mxu0 %v62
    %v84 = vpop.f32.mrf.mxu0
    %v85 = vadd.f32 %v55, %v84
    %86 = vdwg.mxu0
    %vm87 = vcmask 785408
    %88 = vst.msk [vmem:[#allocation7] sm:$0xff] %vm87, %v82
    %89 = vst.msk [vmem:[#allocation7 + $0x8] sm:$0xff] %vm87, %v85
    // Predicated region
    $region22: #{tpu_custom_call.1} parent=1 // pred_check
      _
    $region23: #{tpu_custom_call.1} parent=1 // pred_check_branch
      %91 = sbr.rel (0) target = $region25
    $region24: #{tpu_custom_call.1} parent=1 // pred_region
      %93 = vsyncadd [#allocation4], 0
      %s94 = sshll.u32 [#allocation7], 4
      %s95 = int_to_ptr.vmem [resolvable:$true] %s94
      %s96 = sshll.u32 %s3, 4
      %s97 = int_to_ptr.hbm [resolvable:$true] %s96
      %102 = dma.vmem_to_hbm [thread:$0]  %s95, 256, %s97, [#allocation4], 128, 128, 8
    $region25: #{tpu_custom_call.1} parent=1 // pred_fallthru
      _
    // Predicated region
    $region26: #{tpu_custom_call.1} parent=1 // pred_check
      _
    $region27: #{tpu_custom_call.1} parent=1 // pred_check_branch
      %104 = sbr.rel (0) target = $region29
    $region28: #{tpu_custom_call.1} parent=1 // pred_region
      %106 = dma.done [#allocation4], 256
    $region29: #{tpu_custom_call.1} parent=1 // pred_fallthru
      _
    %107 = vsyncpa [#allocation3], 1
    %108 = vsyncpa [#allocation6], 1
    %109 = vsyncpa [#allocation4], 1

</llo_original>
